<compile_context>
chip_gen: v7x
topology: tpu7x:2x2x1
jax: 0.10.0
libtpu: 0.0.40
codegen_flags: <defaults>
</compile_context>

<pallas_src>
import math

import jax
import jax.numpy as jnp
from jax.experimental import pallas as pl
from jax.experimental.pallas import tpu as pltpu


def _round_up(v, m):
    return ((v + m - 1) // m) * m


def _qnet_fused_kernel(x_ref, w1_ref, w2_ref, w3_ref, w4_ref, w5_ref, out_ref):
    """Fused conv-stack (Toeplitz matmuls) + MLP for one batch tile.

    Batch rides the sublane axis; the flattened channel*length / feature axis rides
    the lanes.  Each weight ref packs [W ; bias] with the bias as the last row
    (static sublane slice).  Matmul operands are bf16; accumulation, bias-add and
    ReLU are f32.  All intermediate activations stay in VMEM.
    """
    def affine(h_bf16, w_ref):
        n_in = w_ref.shape[0] - 1                      # weight rows (sublane-aligned)
        acc = jnp.dot(h_bf16, w_ref[:n_in, :],
                      preferred_element_type=jnp.float32)
        return acc + w_ref[n_in:, :].astype(jnp.float32)   # bias row broadcast (f32)

    h = x_ref[...].astype(jnp.bfloat16)
    h = jnp.maximum(affine(h, w1_ref), 0.0).astype(jnp.bfloat16)   # conv1 + relu
    h = jnp.maximum(affine(h, w2_ref), 0.0).astype(jnp.bfloat16)   # conv2 + relu
    h = jnp.maximum(affine(h, w3_ref), 0.0).astype(jnp.bfloat16)   # conv3 + relu
    h = jnp.maximum(affine(h, w4_ref), 0.0).astype(jnp.bfloat16)   # hiddenfc + relu
    out_ref[...] = affine(h, w5_ref)                                # finalfc (f32)


def qnetwork_forward(x, params, *, b_tile=1024, min_tiles=2):
    """x: (B, state_size) float32 -> (B, action_size) float32."""
    B, S = x.shape
    action_size = params["action_size"]
    w_keys = ("w1", "w2", "w3", "w4", "w5")
    out_pad = params["w5"].shape[1]          # lane-padded output width (mult. of 128)

    # Batch tiling: whole batch if tiny; otherwise aim for >= min_tiles tiles so both
    # v7x TensorCores get work, capped at b_tile rows (multiple of 8 sublanes).
    if B <= 8:
        bt = B
    else:
        bt = min(b_tile, _round_up(pl.cdiv(B, min_tiles), 8))
    grid_b = pl.cdiv(B, bt)

    # VMEM estimate: f32 + bf16 working copies of every activation, resident bf16
    # weights (x2 headroom), double-buffered x/out blocks.  Only raise the scoped
    # limit when a very large tile actually needs it (cap well under v7x's 64 MiB).
    feat_widths = [S] + [params[k].shape[1] for k in w_keys]
    est = (bt * sum(feat_widths) * 6
           + sum(int(params[k].size) for k in w_keys) * 2 * 2
           + 2 * bt * (S + out_pad) * 4)
    cp_kwargs = dict(dimension_semantics=("parallel",))   # batch tiles independent
    if est > 12 * 1024 * 1024:
        cp_kwargs["vmem_limit_bytes"] = min(int(est * 1.5), 48 * 1024 * 1024)

    rep = lambda b: (0, 0)   # weights: constant block index -> DMA'd once, resident
    out_full = pl.pallas_call(
        _qnet_fused_kernel,
        out_shape=jax.ShapeDtypeStruct((B, out_pad), jnp.float32),
        grid=(grid_b,),
        in_specs=[pl.BlockSpec((bt, S), lambda b: (b, 0))]
                 + [pl.BlockSpec(params[k].shape, rep) for k in w_keys],
        out_specs=pl.BlockSpec((bt, out_pad), lambda b: (b, 0)),
        compiler_params=pltpu.CompilerParams(**cp_kwargs),
    )(x, *(params[k] for k in w_keys))

    # NOTE: rows of a partial last batch tile beyond B compute on padding and are
    # dropped on writeback — fine because every row is independent; do NOT add a
    # reduction over the batch axis inside the kernel without masking those rows.
    return out_full[:, :action_size]


def _conv_k2_as_matmul(w, b, L_in, pad):
    """Express Conv1d(kernel_size=K) as a dense matmul on channel-major flats.

    Input layout  (B, Cin*L_in)   == (B, Cin, L_in).reshape(B, -1)
    Output layout (B, Cout*L_out) == (B, Cout, L_out).reshape(B, -1)
    Returns (W_mat, bias_row): W_mat (Cin*L_in, Cout*L_out), bias (1, Cout*L_out).
    Built once per parameter set (pure parameter re-layout, independent of x).
    """
    Cout, Cin, K = w.shape
    L_out = L_in + 2 * pad - (K - 1)
    W = jnp.zeros((Cin, L_in, Cout, L_out), dtype=jnp.float32)
    for t in range(K):
        for j in range(L_out):
            i = j + t - pad
            if 0 <= i < L_in:
                W = W.at[:, i, :, j].add(jnp.transpose(w[:, :, t]))   # (Cin, Cout)
    W = W.reshape(Cin * L_in, Cout * L_out)
    bias = jnp.broadcast_to(b[:, None], (Cout, L_out)).reshape(1, Cout * L_out)
    return W, bias


def _pack(W, bias, in_pad=None, out_pad=None):
    """Zero-pad to lane-friendly widths, append bias as the last row, cast to bf16."""
    n_in, n_out = W.shape
    if out_pad is not None and out_pad > n_out:
        W = jnp.pad(W, ((0, 0), (0, out_pad - n_out)))
        bias = jnp.pad(bias, ((0, 0), (0, out_pad - n_out)))
    if in_pad is not None and in_pad > n_in:
        W = jnp.pad(W, ((0, in_pad - n_in), (0, 0)))
    return jnp.concatenate([W, bias], axis=0).astype(jnp.bfloat16)


def init_params(key, state_size, action_size):
    """Deterministic synthetic parameters (PyTorch-default-like uniform init).

    Returns (kernel_params, raw): kernel_params hold the Toeplitz/FC weight matrices
    with biases folded in as an extra row, zero-padded to lane-dense widths and cast
    to bf16; raw holds the original f32 tensors for the pure-JAX reference.
    """
    S = state_size
    hid_in = 32 * (S + 1)
    hid_out = math.floor(hid_in * 2 / 3)
    ks = jax.random.split(key, 10)

    def u(k, shape, fan_in):
        bound = 1.0 / math.sqrt(fan_in)
        return jax.random.uniform(k, shape, jnp.float32, -bound, bound)

    c1_w = u(ks[0], (4, 1, 2), 1 * 2)
    c1_b = u(ks[1], (4,), 1 * 2)
    c2_w = u(ks[2], (16, 4, 2), 4 * 2)
    c2_b = u(ks[3], (16,), 4 * 2)
    c3_w = u(ks[4], (32, 16, 2), 16 * 2)
    c3_b = u(ks[5], (32,), 16 * 2)
    fc1_w = u(ks[6], (hid_out, hid_in), hid_in)
    fc1_b = u(ks[7], (hid_out,), hid_in)
    fc2_w = u(ks[8], (action_size, hid_out), hid_out)
    fc2_b = u(ks[9], (action_size,), hid_out)

    # Conv layers as dense matmuls over the channel-major flattened layout.
    c1_W, c1_bm = _conv_k2_as_matmul(c1_w, c1_b, S, 1)       # (S,        4*(S+1))
    c2_W, c2_bm = _conv_k2_as_matmul(c2_w, c2_b, S + 1, 0)   # (4*(S+1),  16*S)
    c3_W, c3_bm = _conv_k2_as_matmul(c3_w, c3_b, S, 1)       # (16*S,     32*(S+1))

    p1 = _round_up(4 * (S + 1), 128)      # conv1-out / conv2-in lane padding
    p5 = _round_up(action_size, 128)      # final-output lane padding

    kernel_params = dict(
        w1=_pack(c1_W, c1_bm, out_pad=p1),
        w2=_pack(c2_W, c2_bm, in_pad=p1),
        w3=_pack(c3_W, c3_bm),
        w4=_pack(fc1_w.T, fc1_b.reshape(1, -1)),
        w5=_pack(fc2_w.T, fc2_b.reshape(1, -1), out_pad=p5),
        action_size=action_size,
    )
    raw = dict(c1_w=c1_w, c1_b=c1_b, c2_w=c2_w, c2_b=c2_b,
               c3_w=c3_w, c3_b=c3_b,
               fc1_w=fc1_w, fc1_b=fc1_b, fc2_w=fc2_w, fc2_b=fc2_b)
    return kernel_params, raw


def ref_forward(x, raw):
    """Pure-JAX f32 reference reproducing the PyTorch forward semantics."""
    def conv1d_k2(h, w, b, pad):
        if pad:
            h = jnp.pad(h, ((0, 0), (0, 0), (pad, pad)))
        L = h.shape[-1] - 1
        return (jnp.einsum('oc,bcl->bol', w[:, :, 0], h[:, :, :L])
                + jnp.einsum('oc,bcl->bol', w[:, :, 1], h[:, :, 1:L + 1])
                + b[None, :, None])

    B = x.shape[0]
    h = x[:, None, :]                                   # unsqueeze(1): (B, 1, S)
    h = jax.nn.relu(conv1d_k2(h, raw["c1_w"], raw["c1_b"], 1))
    h = jax.nn.relu(conv1d_k2(h, raw["c2_w"], raw["c2_b"], 0))
    h = jax.nn.relu(conv1d_k2(h, raw["c3_w"], raw["c3_b"], 1))
    h = h.reshape(B, -1)
    h = jax.nn.relu(h @ raw["fc1_w"].T + raw["fc1_b"])
    return h @ raw["fc2_w"].T + raw["fc2_b"]


if __name__ == "__main__":
    state_size, action_size = 8, 4
    key = jax.random.PRNGKey(0)
    k_x, k_x2, k_p = jax.random.split(key, 3)
    params, raw = init_params(k_p, state_size, action_size)

    # bf16 matmul operands (f32 accumulate) -> loosened tolerance vs f32 reference.
    ATOL, RTOL = 3e-2, 5e-2

    # Small-batch check: whole batch in a single tile / grid step.
    batch = 2
    x = jax.random.normal(k_x, (batch, state_size), jnp.float32)
    out = qnetwork_forward(x, params)
    jax.block_until_ready(out)
    ref = ref_forward(x, raw)
    assert out.shape == (batch, action_size), out.shape
    assert jnp.allclose(out, ref, atol=ATOL, rtol=RTOL), \
        float(jnp.max(jnp.abs(out - ref)))

    # Larger-batch check: >= 2 batch tiles (both v7x cores busy) with a partial
    # last tile exercising Pallas' masked writeback of padded rows.
    batch2 = 500
    x2 = jax.random.normal(k_x2, (batch2, state_size), jnp.float32)
    out2 = qnetwork_forward(x2, params)
    jax.block_until_ready(out2)
    ref2 = ref_forward(x2, raw)
    assert out2.shape == (batch2, action_size), out2.shape
    assert jnp.allclose(out2, ref2, atol=ATOL, rtol=RTOL), \
        float(jnp.max(jnp.abs(out2 - ref2)))

    print("KERNEL_OK")
</pallas_src>

<mosaic_0001>
module attributes {stable_mosaic.version = 11 : i64} {
  func.func @_qnet_fused_kernel(%arg0: i32, %arg1: memref<2x8xf32, #tpu.memory_space<vmem>>, %arg2: memref<9x128xbf16, #tpu.memory_space<vmem>>, %arg3: memref<129x128xbf16, #tpu.memory_space<vmem>>, %arg4: memref<129x288xbf16, #tpu.memory_space<vmem>>, %arg5: memref<289x192xbf16, #tpu.memory_space<vmem>>, %arg6: memref<193x128xbf16, #tpu.memory_space<vmem>>, %arg7: memref<2x128xf32, #tpu.memory_space<vmem>>) attributes {dimension_semantics = [#tpu.dimension_semantics<parallel>], iteration_bounds = array<i64: 1>, scalar_prefetch = 0 : i64, scratch_operands = 0 : i64, tpu.core_type = #tpu.core_type<tc>, window_params = [{transform_indices = @transform_0, window_bounds = array<i64: 2, 8>}, {pipeline_mode = #tpu.pipeline_mode<synchronous>, transform_indices = @transform_1, window_bounds = array<i64: 9, 128>}, {pipeline_mode = #tpu.pipeline_mode<synchronous>, transform_indices = @transform_2, window_bounds = array<i64: 129, 128>}, {pipeline_mode = #tpu.pipeline_mode<synchronous>, transform_indices = @transform_3, window_bounds = array<i64: 129, 288>}, {pipeline_mode = #tpu.pipeline_mode<synchronous>, transform_indices = @transform_4, window_bounds = array<i64: 289, 192>}, {pipeline_mode = #tpu.pipeline_mode<synchronous>, transform_indices = @transform_5, window_bounds = array<i64: 193, 128>}, {transform_indices = @transform_6, window_bounds = array<i64: 2, 128>}]} {
    %c0 = arith.constant 0 : index
    %c0_0 = arith.constant 0 : index
    %0 = vector.load %arg1[%c0, %c0_0] : memref<2x8xf32, #tpu.memory_space<vmem>>, vector<2x8xf32>
    %1 = arith.truncf %0 : vector<2x8xf32> to vector<2x8xbf16>
    %c0_1 = arith.constant 0 : index
    %c0_2 = arith.constant 0 : index
    %2 = vector.load %arg2[%c0_1, %c0_2] : memref<9x128xbf16, #tpu.memory_space<vmem>>, vector<8x128xbf16>
    %cst = arith.constant dense<0.000000e+00> : vector<2x128xf32>
    %3 = tpu.matmul %1, %2, %cst {dimension_numbers = #tpu.dot_dimension_numbers<[1], [0], [0], [1], [0, 0, 1, 1], [], []>} : vector<2x8xbf16>, vector<8x128xbf16>, vector<2x128xf32> -> vector<2x128xf32>
    %c8 = arith.constant 8 : index
    %c0_3 = arith.constant 0 : index
    %4 = vector.load %arg2[%c8, %c0_3] : memref<9x128xbf16, #tpu.memory_space<vmem>>, vector<1x128xbf16>
    %5 = arith.extf %4 : vector<1x128xbf16> to vector<1x128xf32>
    %6 = vector.broadcast %5 : vector<1x128xf32> to vector<2x128xf32>
    %7 = arith.addf %3, %6 : vector<2x128xf32>
    %cst_4 = arith.constant 0.000000e+00 : f32
    %8 = vector.broadcast %cst_4 : f32 to vector<2x128xf32>
    %9 = arith.maximumf %7, %8 : vector<2x128xf32>
    %10 = arith.truncf %9 : vector<2x128xf32> to vector<2x128xbf16>
    %c0_5 = arith.constant 0 : index
    %c0_6 = arith.constant 0 : index
    %11 = vector.load %arg3[%c0_5, %c0_6] : memref<129x128xbf16, #tpu.memory_space<vmem>>, vector<128x128xbf16>
    %cst_7 = arith.constant dense<0.000000e+00> : vector<2x128xf32>
    %12 = tpu.matmul %10, %11, %cst_7 {dimension_numbers = #tpu.dot_dimension_numbers<[1], [0], [0], [1], [0, 0, 1, 1], [], []>} : vector<2x128xbf16>, vector<128x128xbf16>, vector<2x128xf32> -> vector<2x128xf32>
    %c128 = arith.constant 128 : index
    %c0_8 = arith.constant 0 : index
    %13 = vector.load %arg3[%c128, %c0_8] : memref<129x128xbf16, #tpu.memory_space<vmem>>, vector<1x128xbf16>
    %14 = arith.extf %13 : vector<1x128xbf16> to vector<1x128xf32>
    %15 = vector.broadcast %14 : vector<1x128xf32> to vector<2x128xf32>
    %16 = arith.addf %12, %15 : vector<2x128xf32>
    %cst_9 = arith.constant 0.000000e+00 : f32
    %17 = vector.broadcast %cst_9 : f32 to vector<2x128xf32>
    %18 = arith.maximumf %16, %17 : vector<2x128xf32>
    %19 = arith.truncf %18 : vector<2x128xf32> to vector<2x128xbf16>
    %c0_10 = arith.constant 0 : index
    %c0_11 = arith.constant 0 : index
    %20 = vector.load %arg4[%c0_10, %c0_11] : memref<129x288xbf16, #tpu.memory_space<vmem>>, vector<128x288xbf16>
    %cst_12 = arith.constant dense<0.000000e+00> : vector<2x288xf32>
    %21 = tpu.matmul %19, %20, %cst_12 {dimension_numbers = #tpu.dot_dimension_numbers<[1], [0], [0], [1], [0, 0, 1, 1], [], []>} : vector<2x128xbf16>, vector<128x288xbf16>, vector<2x288xf32> -> vector<2x288xf32>
    %c128_13 = arith.constant 128 : index
    %c0_14 = arith.constant 0 : index
    %22 = vector.load %arg4[%c128_13, %c0_14] : memref<129x288xbf16, #tpu.memory_space<vmem>>, vector<1x288xbf16>
    %23 = arith.extf %22 : vector<1x288xbf16> to vector<1x288xf32>
    %24 = vector.broadcast %23 : vector<1x288xf32> to vector<2x288xf32>
    %25 = arith.addf %21, %24 : vector<2x288xf32>
    %cst_15 = arith.constant 0.000000e+00 : f32
    %26 = vector.broadcast %cst_15 : f32 to vector<2x288xf32>
    %27 = arith.maximumf %25, %26 : vector<2x288xf32>
    %28 = arith.truncf %27 : vector<2x288xf32> to vector<2x288xbf16>
    %c0_16 = arith.constant 0 : index
    %c0_17 = arith.constant 0 : index
    %29 = vector.load %arg5[%c0_16, %c0_17] : memref<289x192xbf16, #tpu.memory_space<vmem>>, vector<288x192xbf16>
    %cst_18 = arith.constant dense<0.000000e+00> : vector<2x192xf32>
    %30 = tpu.matmul %28, %29, %cst_18 {dimension_numbers = #tpu.dot_dimension_numbers<[1], [0], [0], [1], [0, 0, 1, 1], [], []>} : vector<2x288xbf16>, vector<288x192xbf16>, vector<2x192xf32> -> vector<2x192xf32>
    %c288 = arith.constant 288 : index
    %c0_19 = arith.constant 0 : index
    %31 = vector.load %arg5[%c288, %c0_19] : memref<289x192xbf16, #tpu.memory_space<vmem>>, vector<1x192xbf16>
    %32 = arith.extf %31 : vector<1x192xbf16> to vector<1x192xf32>
    %33 = vector.broadcast %32 : vector<1x192xf32> to vector<2x192xf32>
    %34 = arith.addf %30, %33 : vector<2x192xf32>
    %cst_20 = arith.constant 0.000000e+00 : f32
    %35 = vector.broadcast %cst_20 : f32 to vector<2x192xf32>
    %36 = arith.maximumf %34, %35 : vector<2x192xf32>
    %37 = arith.truncf %36 : vector<2x192xf32> to vector<2x192xbf16>
    %c0_21 = arith.constant 0 : index
    %c0_22 = arith.constant 0 : index
    %38 = vector.load %arg6[%c0_21, %c0_22] : memref<193x128xbf16, #tpu.memory_space<vmem>>, vector<192x128xbf16>
    %cst_23 = arith.constant dense<0.000000e+00> : vector<2x128xf32>
    %39 = tpu.matmul %37, %38, %cst_23 {dimension_numbers = #tpu.dot_dimension_numbers<[1], [0], [0], [1], [0, 0, 1, 1], [], []>} : vector<2x192xbf16>, vector<192x128xbf16>, vector<2x128xf32> -> vector<2x128xf32>
    %c192 = arith.constant 192 : index
    %c0_24 = arith.constant 0 : index
    %40 = vector.load %arg6[%c192, %c0_24] : memref<193x128xbf16, #tpu.memory_space<vmem>>, vector<1x128xbf16>
    %41 = arith.extf %40 : vector<1x128xbf16> to vector<1x128xf32>
    %42 = vector.broadcast %41 : vector<1x128xf32> to vector<2x128xf32>
    %43 = arith.addf %39, %42 : vector<2x128xf32>
    %c0_25 = arith.constant 0 : index
    %c0_26 = arith.constant 0 : index
    %44 = vector.load %arg7[%c0_25, %c0_26] : memref<2x128xf32, #tpu.memory_space<vmem>>, vector<2x128xf32>
    tpu.vector_store %arg7[%c0_25, %c0_26], %43 {strides = array<i32>} : memref<2x128xf32, #tpu.memory_space<vmem>>, vector<2x128xf32>,
    return
  }
  func.func @transform_0(%arg0: i32) -> (i32, i32) {
    %c0_i32 = arith.constant 0 : i32
    %c0_i32_0 = arith.constant 0 : i32
    return %arg0, %c0_i32 : i32, i32
  }
  func.func @transform_1(%arg0: i32) -> (i32, i32) {
    %c0_i32 = arith.constant 0 : i32
    %c0_i32_0 = arith.constant 0 : i32
    %c0_i32_1 = arith.constant 0 : i32
    return %c0_i32, %c0_i32_0 : i32, i32
  }
  func.func @transform_2(%arg0: i32) -> (i32, i32) {
    %c0_i32 = arith.constant 0 : i32
    %c0_i32_0 = arith.constant 0 : i32
    %c0_i32_1 = arith.constant 0 : i32
    return %c0_i32, %c0_i32_0 : i32, i32
  }
  func.func @transform_3(%arg0: i32) -> (i32, i32) {
    %c0_i32 = arith.constant 0 : i32
    %c0_i32_0 = arith.constant 0 : i32
    %c0_i32_1 = arith.constant 0 : i32
    return %c0_i32, %c0_i32_0 : i32, i32
  }
  func.func @transform_4(%arg0: i32) -> (i32, i32) {
    %c0_i32 = arith.constant 0 : i32
    %c0_i32_0 = arith.constant 0 : i32
    %c0_i32_1 = arith.constant 0 : i32
    return %c0_i32, %c0_i32_0 : i32, i32
  }
  func.func @transform_5(%arg0: i32) -> (i32, i32) {
    %c0_i32 = arith.constant 0 : i32
    %c0_i32_0 = arith.constant 0 : i32
    %c0_i32_1 = arith.constant 0 : i32
    return %c0_i32, %c0_i32_0 : i32, i32
  }
  func.func @transform_6(%arg0: i32) -> (i32, i32) {
    %c0_i32 = arith.constant 0 : i32
    %c0_i32_0 = arith.constant 0 : i32
    return %arg0, %c0_i32 : i32, i32
  }
}

</mosaic_0001>

<llo_original>
// kernel: tpu_custom_call.1
$region0: #{tpu_custom_call.1}
  #allocation0 [shape = 'u32[]', space=smem, size = 0x4, offset = 0x4, fixed_abs, tag = 'smem constant byte address 0x4 - core index']
  #allocation1 [shape = 'u32[144,128]{1,0:T(1,128)}', space=vmem, size = 0x12000, scoped, tag = 'internal scratch']
  %s0 = inlined_call_operand.vmem [shape: f32[2,8], index: 0, kind: input, shape index: {}]
  %s1 = inlined_call_operand.vmem [shape: bf16[9,128], index: 1, kind: input, shape index: {}]
  %s2 = inlined_call_operand.vmem [shape: bf16[129,128], index: 2, kind: input, shape index: {}]
  %s3 = inlined_call_operand.vmem [shape: bf16[129,288], index: 3, kind: input, shape index: {}]
  %s4 = inlined_call_operand.vmem [shape: bf16[289,192], index: 4, kind: input, shape index: {}]
  %s5 = inlined_call_operand.vmem [shape: bf16[193,128], index: 5, kind: input, shape index: {}]
  %s6 = inlined_call_operand.hbm [shape: f32[2,128], index: 6, kind: output, shape index: {}]
  %s7 = sld [smem:[#allocation0]]
  $region34: #{tpu_custom_call.1} parent=0
    _
  %s9 = ssub.s32 1, %s7
  %s10 = scalar_select 0, %s9, %s7
  $region1: #{tpu_custom_call.1} parent=0
    #allocation2 [shape = 'u8[1024]{0}', space=vmem, size = 0x400, scoped, tag = 'output window, operand 0, single buffered']
    #allocation3 [shape = 's32[1]{0}', space=sflag, size = 0x4, scoped, tag = 'scoped memory for tpu_custom_call.1']
    %11 = vsyncpa [#allocation3], 0
    // Predicated region
    $region2: #{tpu_custom_call.1} parent=1 // pred_check
      _
    $region3: #{tpu_custom_call.1} parent=1 // pred_check_branch
      %13 = sbr.rel (0) target = $region5
    $region4: #{tpu_custom_call.1} parent=1 // pred_region
      _
    $region5: #{tpu_custom_call.1} parent=1 // pred_fallthru
      _
    // Predicated region
    $region6: #{tpu_custom_call.1} parent=1 // pred_check
      _
    $region7: #{tpu_custom_call.1} parent=1 // pred_check_branch
      %15 = sbr.rel (0) target = $region9
    $region8: #{tpu_custom_call.1} parent=1 // pred_region
      _
    $region9: #{tpu_custom_call.1} parent=1 // pred_fallthru
      _
    // Predicated region
    $region10: #{tpu_custom_call.1} parent=1 // pred_check
      _
    $region11: #{tpu_custom_call.1} parent=1 // pred_check_branch
      %17 = sbr.rel (0) target = $region13
    $region12: #{tpu_custom_call.1} parent=1 // pred_region
      _
    $region13: #{tpu_custom_call.1} parent=1 // pred_fallthru
      _
    // Predicated region
    $region14: #{tpu_custom_call.1} parent=1 // pred_check
      _
    $region15: #{tpu_custom_call.1} parent=1 // pred_check_branch
      %19 = sbr.rel (0) target = $region17
    $region16: #{tpu_custom_call.1} parent=1 // pred_region
      _
    $region17: #{tpu_custom_call.1} parent=1 // pred_fallthru
      _
    // Predicated region
    $region18: #{tpu_custom_call.1} parent=1 // pred_check
      _
    $region19: #{tpu_custom_call.1} parent=1 // pred_check_branch
      %21 = sbr.rel (0) target = $region21
    $region20: #{tpu_custom_call.1} parent=1 // pred_region
      _
    $region21: #{tpu_custom_call.1} parent=1 // pred_fallthru
      _
    // Predicated region
    $region22: #{tpu_custom_call.1} parent=1 // pred_check
      _
    $region23: #{tpu_custom_call.1} parent=1 // pred_check_branch
      %23 = sbr.rel (0) target = $region25
    $region24: #{tpu_custom_call.1} parent=1 // pred_region
      _
    $region25: #{tpu_custom_call.1} parent=1 // pred_fallthru
      _
    %v25 = vld [vmem:[%s0] sm:$0x3]
    %v26 = vpack.c.bf16 %v25, %v25
    %v27 = vld [vmem:[%s1] sm:$0xf]
    %v28 = vld [vmem:[%s1 + $0x4] sm:$0x1]
    %v29 = vunpack.c.l.bf16 %v28
    %v30 = vlaneseq
    %v31 = vshrl.u32 %v30, 7
    %v32 = vsub.s32 0, %v31
    %v33 = vrot.slane %v29, %v32
    %vm34 = vcmask 64512
    %v36 = vsel %vm34, %v26, 0
    %vm38 = vcmask 1043456
    %v40 = vsel %vm38, %v27, 0
    %42 = vmatprep.subr.bf16.mxu0 0
    %43 = vmatpush1.bf16.msra.mxu0 %v40
    %44 = vmatprep.subr.bf16.mxu0 0
    %45 = vmatpush1.bf16.msra.mxu0 0
    %46 = vmatprep.subr.bf16.mxu0 0
    %47 = vmatpush1.bf16.msra.mxu0 0
    %48 = vmatprep.subr.bf16.mxu0 0
    %49 = vmatpush1.bf16.msra.mxu0 0
    %50 = vmatprep.subr.bf16.mxu0 0
    %51 = vmatpush1.bf16.msra.mxu0 0
    %52 = vmatprep.subr.bf16.mxu0 0
    %53 = vmatpush1.bf16.msra.mxu0 0
    %54 = vmatprep.subr.bf16.mxu0 0
    %55 = vmatpush1.bf16.msra.mxu0 0
    %56 = vmatprep.subr.bf16.mxu0 0
    %57 = vmatpush1.bf16.msra.mxu0 0
    %58 = vmatprep.subr.bf16.mxu0 0
    %59 = vmatpush1.bf16.msra.mxu0 0
    %60 = vmatprep.subr.bf16.mxu0 0
    %61 = vmatpush1.bf16.msra.mxu0 0
    %62 = vmatprep.subr.bf16.mxu0 0
    %63 = vmatpush1.bf16.msra.mxu0 0
    %64 = vmatprep.subr.bf16.mxu0 0
    %65 = vmatpush1.bf16.msra.mxu0 0
    %66 = vmatprep.subr.bf16.mxu0 0
    %67 = vmatpush1.bf16.msra.mxu0 0
    %68 = vmatprep.subr.bf16.mxu0 0
    %69 = vmatpush1.bf16.msra.mxu0 0
    %70 = vmatprep.subr.bf16.mxu0 0
    %71 = vmatpush1.bf16.msra.mxu0 0
    %72 = vmatprep.subr.bf16.mxu0 0
    %73 = vmatpush1.bf16.msra.mxu0 0
    %74 = vmatprep.mubr.bf16.mxu0 0
    %75 = vmatmul.mubr.bf16.gmra.mrb[0].mxu0 %v36
    %v76 = vpop.f32.mrb[0].mxu0
    %v77 = vadd.f32 %v33, %v76
    %v78 = vpop.f32.mrb[0].mxu0
    %v79 = vpop.f32.mrb[0].mxu0
    %v80 = vpop.f32.mrb[0].mxu0
    %81 = vdwg.mxu0
    %v82 = vmax.f32 %v77, 0.0
    %v83 = vpack.c.bf16 %v82, %v82
    %v84 = vld [vmem:[%s2] sm:$0xf]
    %v85 = vld [vmem:[%s2 + $0x4] sm:$0xf]
    %v86 = vld [vmem:[%s2 + $0x8] sm:$0xf]
    %v87 = vld [vmem:[%s2 + $0xc] sm:$0xf]
    %v88 = vld [vmem:[%s2 + $0x10] sm:$0xf]
    %v89 = vld [vmem:[%s2 + $0x14] sm:$0xf]
    %v90 = vld [vmem:[%s2 + $0x18] sm:$0xf]
    %v91 = vld [vmem:[%s2 + $0x1c] sm:$0xf]
    %v92 = vld [vmem:[%s2 + $0x20] sm:$0xf]
    %v93 = vld [vmem:[%s2 + $0x24] sm:$0xf]
    %v94 = vld [vmem:[%s2 + $0x28] sm:$0xf]
    %v95 = vld [vmem:[%s2 + $0x2c] sm:$0xf]
    %v96 = vld [vmem:[%s2 + $0x30] sm:$0xf]
    %v97 = vld [vmem:[%s2 + $0x34] sm:$0xf]
    %v98 = vld [vmem:[%s2 + $0x38] sm:$0xf]
    %v99 = vld [vmem:[%s2 + $0x3c] sm:$0xf]
    %v100 = vld [vmem:[%s2 + $0x40] sm:$0x1]
    %v101 = vunpack.c.l.bf16 %v100
    %v102 = vlaneseq
    %v103 = vshrl.u32 %v102, 7
    %v104 = vsub.s32 0, %v103
    %v105 = vrot.slane %v101, %v104
    %v122 = vunpack.c.l.b16 %v84
    %v123 = vunpack.c.l.b16 %v85
    %v124 = vunpack.c.l.b16 %v86
    %v125 = vunpack.c.l.b16 %v87
    %v126 = vunpack.c.l.b16 %v88
    %v127 = vunpack.c.l.b16 %v89
    %v128 = vunpack.c.l.b16 %v90
    %v129 = vunpack.c.l.b16 %v91
    %v130 = vunpack.c.l.b16 %v92
    %v131 = vunpack.c.l.b16 %v93
    %v132 = vunpack.c.l.b16 %v94
    %v133 = vunpack.c.l.b16 %v95
    %v134 = vunpack.c.l.b16 %v96
    %v135 = vunpack.c.l.b16 %v97
    %v136 = vunpack.c.l.b16 %v98
    %v137 = vunpack.c.l.b16 %v99
    %v138 = vpack.c.b16 %v123, %v122
    %v139 = vpack.c.b16 %v125, %v124
    %v140 = vpack.c.b16 %v127, %v126
    %v141 = vpack.c.b16 %v129, %v128
    %v142 = vpack.c.b16 %v131, %v130
    %v143 = vpack.c.b16 %v133, %v132
    %v144 = vpack.c.b16 %v135, %v134
    %v145 = vpack.c.b16 %v137, %v136
    %154 = vmatprep.subr.bf16.mxu0 0
    %155 = vmatpush1.bf16.msra.mxu0 %v138
    %156 = vmatprep.subr.bf16.mxu0 0
    %157 = vmatpush1.bf16.msra.mxu0 %v139
    %158 = vmatprep.subr.bf16.mxu0 0
    %159 = vmatpush1.bf16.msra.mxu0 %v140
    %160 = vmatprep.subr.bf16.mxu0 0
    %161 = vmatpush1.bf16.msra.mxu0 %v141
    %162 = vmatprep.subr.bf16.mxu0 0
    %163 = vmatpush1.bf16.msra.mxu0 %v142
    %164 = vmatprep.subr.bf16.mxu0 0
    %165 = vmatpush1.bf16.msra.mxu0 %v143
    %166 = vmatprep.subr.bf16.mxu0 0
    %167 = vmatpush1.bf16.msra.mxu0 %v144
    %168 = vmatprep.subr.bf16.mxu0 0
    %169 = vmatpush1.bf16.msra.mxu0 %v145
    %170 = vmatprep.subr.bf16.mxu0 0
    %171 = vmatpush1.bf16.msra.mxu0 0
    %172 = vmatprep.subr.bf16.mxu0 0
    %173 = vmatpush1.bf16.msra.mxu0 0
    %174 = vmatprep.subr.bf16.mxu0 0
    %175 = vmatpush1.bf16.msra.mxu0 0
    %176 = vmatprep.subr.bf16.mxu0 0
    %177 = vmatpush1.bf16.msra.mxu0 0
    %178 = vmatprep.subr.bf16.mxu0 0
    %179 = vmatpush1.bf16.msra.mxu0 0
    %180 = vmatprep.subr.bf16.mxu0 0
    %181 = vmatpush1.bf16.msra.mxu0 0
    %182 = vmatprep.subr.bf16.mxu0 0
    %183 = vmatpush1.bf16.msra.mxu0 0
    %184 = vmatprep.subr.bf16.mxu0 0
    %185 = vmatpush1.bf16.msra.mxu0 0
    %186 = vmatprep.mubr.bf16.mxu0 0
    %187 = vmatmul.mubr.bf16.gmra.mrb[0].mxu0 %v83
    %v188 = vpop.f32.mrb[0].mxu0
    %v189 = vadd.f32 %v105, %v188
    %v190 = vpop.f32.mrb[0].mxu0
    %v191 = vpop.f32.mrb[0].mxu0
    %v192 = vpop.f32.mrb[0].mxu0
    %193 = vdwg.mxu0
    %v194 = vmax.f32 %v189, 0.0
    %v195 = vpack.c.bf16 %v194, %v194
    %v196 = vld [vmem:[%s3] sm:$0xff]
    %v197 = vld [vmem:[%s3 + $0x8] sm:$0xf]
    %v198 = vld [vmem:[%s3 + $0xc] sm:$0xff]
    %v199 = vld [vmem:[%s3 + $0x14] sm:$0xf]
    %v200 = vld [vmem:[%s3 + $0x18] sm:$0xff]
    %v201 = vld [vmem:[%s3 + $0x20] sm:$0xf]
    %v202 = vld [vmem:[%s3 + $0x24] sm:$0xff]
    %v203 = vld [vmem:[%s3 + $0x2c] sm:$0xf]
    %v204 = vld [vmem:[%s3 + $0x30] sm:$0xff]
    %v205 = vld [vmem:[%s3 + $0x38] sm:$0xf]
    %v206 = vld [vmem:[%s3 + $0x3c] sm:$0xff]
    %v207 = vld [vmem:[%s3 + $0x44] sm:$0xf]
    %v208 = vld [vmem:[%s3 + $0x48] sm:$0xff]
    %v209 = vld [vmem:[%s3 + $0x50] sm:$0xf]
    %v210 = vld [vmem:[%s3 + $0x54] sm:$0xff]
    %v211 = vld [vmem:[%s3 + $0x5c] sm:$0xf]
    %v212 = vld [vmem:[%s3 + $0x60] sm:$0xff]
    %v213 = vld [vmem:[%s3 + $0x68] sm:$0xf]
    %v214 = vld [vmem:[%s3 + $0x6c] sm:$0xff]
    %v215 = vld [vmem:[%s3 + $0x74] sm:$0xf]
    %v216 = vld [vmem:[%s3 + $0x78] sm:$0xff]
    %v217 = vld [vmem:[%s3 + $0x80] sm:$0xf]
    %v218 = vld [vmem:[%s3 + $0x84] sm:$0xff]
    %v219 = vld [vmem:[%s3 + $0x8c] sm:$0xf]
    %v220 = vld [vmem:[%s3 + $0x90] sm:$0xff]
    %v221 = vld [vmem:[%s3 + $0x98] sm:$0xf]
    %v222 = vld [vmem:[%s3 + $0x9c] sm:$0xff]
    %v223 = vld [vmem:[%s3 + $0xa4] sm:$0xf]
    %v224 = vld [vmem:[%s3 + $0xa8] sm:$0xff]
    %v225 = vld [vmem:[%s3 + $0xb0] sm:$0xf]
    %v226 = vld [vmem:[%s3 + $0xb4] sm:$0xff]
    %v227 = vld [vmem:[%s3 + $0xbc] sm:$0xf]
    %v228 = vld [vmem:[%s3 + $0xc0] sm:$0x11]
    %v229 = vld [vmem:[%s3 + $0xc8] sm:$0x1]
    %v230 = vunpack.c.l.bf16 %v228
    %v231 = vunpack.c.h.bf16 %v228
    %v232 = vunpack.c.l.bf16 %v229
    %v233 = vlaneseq
    %v234 = vshrl.u32 %v233, 7
    %v235 = vsub.s32 0, %v234
    %v236 = vrot.slane %v230, %v235
    %v237 = vlaneseq
    %v238 = vshrl.u32 %v237, 7
    %v239 = vsub.s32 0, %v238
    %v240 = vrot.slane %v231, %v239
    %v241 = vlaneseq
    %v242 = vshrl.u32 %v241, 7
    %v243 = vsub.s32 0, %v242
    %v244 = vrot.slane %v232, %v243
    %v277 = vunpack.c.l.b16 %v196
    %v278 = vunpack.c.h.b16 %v196
    %v279 = vunpack.c.l.b16 %v197
    %v280 = vunpack.c.l.b16 %v198
    %v281 = vunpack.c.h.b16 %v198
    %v282 = vunpack.c.l.b16 %v199
    %v283 = vunpack.c.l.b16 %v200
    %v284 = vunpack.c.h.b16 %v200
    %v285 = vunpack.c.l.b16 %v201
    %v286 = vunpack.c.l.b16 %v202
    %v287 = vunpack.c.h.b16 %v202
    %v288 = vunpack.c.l.b16 %v203
    %v289 = vunpack.c.l.b16 %v204
    %v290 = vunpack.c.h.b16 %v204
    %v291 = vunpack.c.l.b16 %v205
    %v292 = vunpack.c.l.b16 %v206
    %v293 = vunpack.c.h.b16 %v206
    %v294 = vunpack.c.l.b16 %v207
    %v295 = vunpack.c.l.b16 %v208
    %v296 = vunpack.c.h.b16 %v208
    %v297 = vunpack.c.l.b16 %v209
    %v298 = vunpack.c.l.b16 %v210
    %v299 = vunpack.c.h.b16 %v210
    %v300 = vunpack.c.l.b16 %v211
    %v301 = vunpack.c.l.b16 %v212
    %v302 = vunpack.c.h.b16 %v212
    %v303 = vunpack.c.l.b16 %v213
    %v304 = vunpack.c.l.b16 %v214
    %v305 = vunpack.c.h.b16 %v214
    %v306 = vunpack.c.l.b16 %v215
    %v307 = vunpack.c.l.b16 %v216
    %v308 = vunpack.c.h.b16 %v216
    %v309 = vunpack.c.l.b16 %v217
    %v310 = vunpack.c.l.b16 %v218
    %v311 = vunpack.c.h.b16 %v218
    %v312 = vunpack.c.l.b16 %v219
    %v313 = vunpack.c.l.b16 %v220
    %v314 = vunpack.c.h.b16 %v220
    %v315 = vunpack.c.l.b16 %v221
    %v316 = vunpack.c.l.b16 %v222
    %v317 = vunpack.c.h.b16 %v222
    %v318 = vunpack.c.l.b16 %v223
    %v319 = vunpack.c.l.b16 %v224
    %v320 = vunpack.c.h.b16 %v224
    %v321 = vunpack.c.l.b16 %v225
    %v322 = vunpack.c.l.b16 %v226
    %v323 = vunpack.c.h.b16 %v226
    %v324 = vunpack.c.l.b16 %v227
    %v325 = vpack.c.b16 %v280, %v277
    %v326 = vpack.c.b16 %v281, %v278
    %v327 = vpack.c.b16 %v282, %v279
    %v328 = vpack.c.b16 %v286, %v283
    %v329 = vpack.c.b16 %v287, %v284
    %v330 = vpack.c.b16 %v288, %v285
    %v331 = vpack.c.b16 %v292, %v289
    %v332 = vpack.c.b16 %v293, %v290
    %v333 = vpack.c.b16 %v294, %v291
    %v334 = vpack.c.b16 %v298, %v295
    %v335 = vpack.c.b16 %v299, %v296
    %v336 = vpack.c.b16 %v300, %v297
    %v337 = vpack.c.b16 %v304, %v301
    %v338 = vpack.c.b16 %v305, %v302
    %v339 = vpack.c.b16 %v306, %v303
    %v340 = vpack.c.b16 %v310, %v307
    %v341 = vpack.c.b16 %v311, %v308
    %v342 = vpack.c.b16 %v312, %v309
    %v343 = vpack.c.b16 %v316, %v313
    %v344 = vpack.c.b16 %v317, %v314
    %v345 = vpack.c.b16 %v318, %v315
    %v346 = vpack.c.b16 %v322, %v319
    %v347 = vpack.c.b16 %v323, %v320
    %v348 = vpack.c.b16 %v324, %v321
    %373 = vmatprep.subr.bf16.mxu0 %v326
    %374 = vmatpush1.bf16.msra.mxu0 %v325
    %375 = vmatprep.subr.bf16.mxu0 %v329
    %376 = vmatpush1.bf16.msra.mxu0 %v328
    %377 = vmatprep.subr.bf16.mxu0 %v332
    %378 = vmatpush1.bf16.msra.mxu0 %v331
    %379 = vmatprep.subr.bf16.mxu0 %v335
    %380 = vmatpush1.bf16.msra.mxu0 %v334
    %381 = vmatprep.subr.bf16.mxu0 %v338
    %382 = vmatpush1.bf16.msra.mxu0 %v337
    %383 = vmatprep.subr.bf16.mxu0 %v341
    %384 = vmatpush1.bf16.msra.mxu0 %v340
    %385 = vmatprep.subr.bf16.mxu0 %v344
    %386 = vmatpush1.bf16.msra.mxu0 %v343
    %387 = vmatprep.subr.bf16.mxu0 %v347
    %388 = vmatpush1.bf16.msra.mxu0 %v346
    %389 = vmatprep.subr.bf16.mxu0 0
    %390 = vmatpush1.bf16.msra.mxu0 0
    %391 = vmatprep.subr.bf16.mxu0 0
    %392 = vmatpush1.bf16.msra.mxu0 0
    %393 = vmatprep.subr.bf16.mxu0 0
    %394 = vmatpush1.bf16.msra.mxu0 0
    %395 = vmatprep.subr.bf16.mxu0 0
    %396 = vmatpush1.bf16.msra.mxu0 0
    %397 = vmatprep.subr.bf16.mxu0 0
    %398 = vmatpush1.bf16.msra.mxu0 0
    %399 = vmatprep.subr.bf16.mxu0 0
    %400 = vmatpush1.bf16.msra.mxu0 0
    %401 = vmatprep.subr.bf16.mxu0 0
    %402 = vmatpush1.bf16.msra.mxu0 0
    %403 = vmatprep.subr.bf16.mxu0 0
    %404 = vmatpush1.bf16.msra.mxu0 0
    %405 = vmatprep.mubr.bf16.mxu0 0
    %406 = vmatmul.mubr.bf16.gmra.mrb[0].mxu0 %v195
    %v407 = vpop.f32.mrb[0].mxu0
    %v408 = vadd.f32 %v236, %v407
    %v409 = vpop.f32.mrb[0].mxu0
    %v410 = vadd.f32 %v240, %v409
    %v411 = vpop.f32.mrb[0].mxu0
    %v412 = vpop.f32.mrb[0].mxu0
    %413 = vdwg.mxu0
    %414 = vmatprep.subr.bf16.mxu0 0
    %415 = vmatpush1.bf16.msra.mxu0 %v327
    %416 = vmatprep.subr.bf16.mxu0 0
    %417 = vmatpush1.bf16.msra.mxu0 %v330
    %418 = vmatprep.subr.bf16.mxu0 0
    %419 = vmatpush1.bf16.msra.mxu0 %v333
    %420 = vmatprep.subr.bf16.mxu0 0
    %421 = vmatpush1.bf16.msra.mxu0 %v336
    %422 = vmatprep.subr.bf16.mxu0 0
    %423 = vmatpush1.bf16.msra.mxu0 %v339
    %424 = vmatprep.subr.bf16.mxu0 0
    %425 = vmatpush1.bf16.msra.mxu0 %v342
    %426 = vmatprep.subr.bf16.mxu0 0
    %427 = vmatpush1.bf16.msra.mxu0 %v345
    %428 = vmatprep.subr.bf16.mxu0 0
    %429 = vmatpush1.bf16.msra.mxu0 %v348
    %430 = vmatprep.subr.bf16.mxu0 0
    %431 = vmatpush1.bf16.msra.mxu0 0
    %432 = vmatprep.subr.bf16.mxu0 0
    %433 = vmatpush1.bf16.msra.mxu0 0
    %434 = vmatprep.subr.bf16.mxu0 0
    %435 = vmatpush1.bf16.msra.mxu0 0
    %436 = vmatprep.subr.bf16.mxu0 0
    %437 = vmatpush1.bf16.msra.mxu0 0
    %438 = vmatprep.subr.bf16.mxu0 0
    %439 = vmatpush1.bf16.msra.mxu0 0
    %440 = vmatprep.subr.bf16.mxu0 0
    %441 = vmatpush1.bf16.msra.mxu0 0
    %442 = vmatprep.subr.bf16.mxu0 0
    %443 = vmatpush1.bf16.msra.mxu0 0
    %444 = vmatprep.subr.bf16.mxu0 0
    %445 = vmatpush1.bf16.msra.mxu0 0
    %446 = vmatprep.mubr.bf16.mxu0 0
    %447 = vmatmul.mubr.bf16.gmra.mrb[0].mxu0 %v195
    %v448 = vpop.f32.mrb[0].mxu0
    %v449 = vadd.f32 %v244, %v448
    %v450 = vpop.f32.mrb[0].mxu0
    %v451 = vpop.f32.mrb[0].mxu0
    %v452 = vpop.f32.mrb[0].mxu0
    %453 = vdwg.mxu0
    %v454 = vmax.f32 %v408, 0.0
    %v455 = vmax.f32 %v410, 0.0
    %v456 = vmax.f32 %v449, 0.0
    %v457 = vpack.c.bf16 %v454, %v454
    %v458 = vpack.c.bf16 %v455, %v455
    %v459 = vpack.c.bf16 %v456, %v456
    %v460 = vld [vmem:[%s4] sm:$0xff]
    %v461 = vld [vmem:[%s4 + $0x8] sm:$0xff]
    %v462 = vld [vmem:[%s4 + $0x10] sm:$0xff]
    %v463 = vld [vmem:[%s4 + $0x18] sm:$0xff]
    %v464 = vld [vmem:[%s4 + $0x20] sm:$0xff]
    %v465 = vld [vmem:[%s4 + $0x28] sm:$0xff]
    %v466 = vld [vmem:[%s4 + $0x30] sm:$0xff]
    %v467 = vld [vmem:[%s4 + $0x38] sm:$0xff]
    %v468 = vld [vmem:[%s4 + $0x40] sm:$0xff]
    %v469 = vld [vmem:[%s4 + $0x48] sm:$0xff]
    %v470 = vld [vmem:[%s4 + $0x50] sm:$0xff]
    %v471 = vld [vmem:[%s4 + $0x58] sm:$0xff]
    %v472 = vld [vmem:[%s4 + $0x60] sm:$0xff]
    %v473 = vld [vmem:[%s4 + $0x68] sm:$0xff]
    %v474 = vld [vmem:[%s4 + $0x70] sm:$0xff]
    %v475 = vld [vmem:[%s4 + $0x78] sm:$0xff]
    %v476 = vld [vmem:[%s4 + $0x80] sm:$0xff]
    %v477 = vld [vmem:[%s4 + $0x88] sm:$0xff]
    %v478 = vld [vmem:[%s4 + $0x90] sm:$0xff]
    %v479 = vld [vmem:[%s4 + $0x98] sm:$0xff]
    %v480 = vld [vmem:[%s4 + $0xa0] sm:$0xff]
    %v481 = vld [vmem:[%s4 + $0xa8] sm:$0xff]
    %v482 = vld [vmem:[%s4 + $0xb0] sm:$0xff]
    %v483 = vld [vmem:[%s4 + $0xb8] sm:$0xff]
    %v484 = vld [vmem:[%s4 + $0xc0] sm:$0xff]
    %v485 = vld [vmem:[%s4 + $0xc8] sm:$0xff]
    %v486 = vld [vmem:[%s4 + $0xd0] sm:$0xff]
    %v487 = vld [vmem:[%s4 + $0xd8] sm:$0xff]
    %v488 = vld [vmem:[%s4 + $0xe0] sm:$0xff]
    %v489 = vld [vmem:[%s4 + $0xe8] sm:$0xff]
    %v490 = vld [vmem:[%s4 + $0xf0] sm:$0xff]
    %v491 = vld [vmem:[%s4 + $0xf8] sm:$0xff]
    %v492 = vld [vmem:[%s4 + $0x100] sm:$0xff]
    %v493 = vld [vmem:[%s4 + $0x108] sm:$0xff]
    %v494 = vld [vmem:[%s4 + $0x110] sm:$0xff]
    %v495 = vld [vmem:[%s4 + $0x118] sm:$0xff]
    %v496 = vld [vmem:[%s4 + $0x120] sm:$0x11]
    %v497 = vunpack.c.l.bf16 %v496
    %v498 = vunpack.c.h.bf16 %v496
    %v499 = vlaneseq
    %v500 = vshrl.u32 %v499, 7
    %v501 = vsub.s32 0, %v500
    %v502 = vrot.slane %v497, %v501
    %v503 = vlaneseq
    %v504 = vshrl.u32 %v503, 7
    %v505 = vsub.s32 0, %v504
    %v506 = vrot.slane %v498, %v505
    %v543 = vunpack.c.l.b16 %v460
    %v544 = vunpack.c.h.b16 %v460
    %v545 = vunpack.c.l.b16 %v461
    %v546 = vunpack.c.h.b16 %v461
    %v547 = vunpack.c.l.b16 %v462
    %v548 = vunpack.c.h.b16 %v462
    %v549 = vunpack.c.l.b16 %v463
    %v550 = vunpack.c.h.b16 %v463
    %v551 = vunpack.c.l.b16 %v464
    %v552 = vunpack.c.h.b16 %v464
    %v553 = vunpack.c.l.b16 %v465
    %v554 = vunpack.c.h.b16 %v465
    %v555 = vunpack.c.l.b16 %v466
    %v556 = vunpack.c.h.b16 %v466
    %v557 = vunpack.c.l.b16 %v467
    %v558 = vunpack.c.h.b16 %v467
    %v559 = vunpack.c.l.b16 %v468
    %v560 = vunpack.c.h.b16 %v468
    %v561 = vunpack.c.l.b16 %v469
    %v562 = vunpack.c.h.b16 %v469
    %v563 = vunpack.c.l.b16 %v470
    %v564 = vunpack.c.h.b16 %v470
    %v565 = vunpack.c.l.b16 %v471
    %v566 = vunpack.c.h.b16 %v471
    %v567 = vunpack.c.l.b16 %v472
    %v568 = vunpack.c.h.b16 %v472
    %v569 = vunpack.c.l.b16 %v473
    %v570 = vunpack.c.h.b16 %v473
    %v571 = vunpack.c.l.b16 %v474
    %v572 = vunpack.c.h.b16 %v474
    %v573 = vunpack.c.l.b16 %v475
    %v574 = vunpack.c.h.b16 %v475
    %v575 = vunpack.c.l.b16 %v476
    %v576 = vunpack.c.h.b16 %v476
    %v577 = vunpack.c.l.b16 %v477
    %v578 = vunpack.c.h.b16 %v477
    %v579 = vunpack.c.l.b16 %v478
    %v580 = vunpack.c.h.b16 %v478
    %v581 = vunpack.c.l.b16 %v479
    %v582 = vunpack.c.h.b16 %v479
    %v583 = vunpack.c.l.b16 %v480
    %v584 = vunpack.c.h.b16 %v480
    %v585 = vunpack.c.l.b16 %v481
    %v586 = vunpack.c.h.b16 %v481
    %v587 = vunpack.c.l.b16 %v482
    %v588 = vunpack.c.h.b16 %v482
    %v589 = vunpack.c.l.b16 %v483
    %v590 = vunpack.c.h.b16 %v483
    %v591 = vunpack.c.l.b16 %v484
    %v592 = vunpack.c.h.b16 %v484
    %v593 = vunpack.c.l.b16 %v485
    %v594 = vunpack.c.h.b16 %v485
    %v595 = vunpack.c.l.b16 %v486
    %v596 = vunpack.c.h.b16 %v486
    %v597 = vunpack.c.l.b16 %v487
    %v598 = vunpack.c.h.b16 %v487
    %v599 = vunpack.c.l.b16 %v488
    %v600 = vunpack.c.h.b16 %v488
    %v601 = vunpack.c.l.b16 %v489
    %v602 = vunpack.c.h.b16 %v489
    %v603 = vunpack.c.l.b16 %v490
    %v604 = vunpack.c.h.b16 %v490
    %v605 = vunpack.c.l.b16 %v491
    %v606 = vunpack.c.h.b16 %v491
    %v607 = vunpack.c.l.b16 %v492
    %v608 = vunpack.c.h.b16 %v492
    %v609 = vunpack.c.l.b16 %v493
    %v610 = vunpack.c.h.b16 %v493
    %v611 = vunpack.c.l.b16 %v494
    %v612 = vunpack.c.h.b16 %v494
    %v613 = vunpack.c.l.b16 %v495
    %v614 = vunpack.c.h.b16 %v495
    %v615 = vpack.c.b16 %v545, %v543
    %v616 = vpack.c.b16 %v546, %v544
    %v617 = vpack.c.b16 %v549, %v547
    %v618 = vpack.c.b16 %v550, %v548
    %v619 = vpack.c.b16 %v553, %v551
    %v620 = vpack.c.b16 %v554, %v552
    %v621 = vpack.c.b16 %v557, %v555
    %v622 = vpack.c.b16 %v558, %v556
    %v623 = vpack.c.b16 %v561, %v559
    %v624 = vpack.c.b16 %v562, %v560
    %v625 = vpack.c.b16 %v565, %v563
    %v626 = vpack.c.b16 %v566, %v564
    %v627 = vpack.c.b16 %v569, %v567
    %v628 = vpack.c.b16 %v570, %v568
    %v629 = vpack.c.b16 %v573, %v571
    %v630 = vpack.c.b16 %v574, %v572
    %v631 = vpack.c.b16 %v577, %v575
    %v632 = vpack.c.b16 %v578, %v576
    %v633 = vpack.c.b16 %v581, %v579
    %v634 = vpack.c.b16 %v582, %v580
    %v635 = vpack.c.b16 %v585, %v583
    %v636 = vpack.c.b16 %v586, %v584
    %v637 = vpack.c.b16 %v589, %v587
    %v638 = vpack.c.b16 %v590, %v588
    %v639 = vpack.c.b16 %v593, %v591
    %v640 = vpack.c.b16 %v594, %v592
    %v641 = vpack.c.b16 %v597, %v595
    %v642 = vpack.c.b16 %v598, %v596
    %v643 = vpack.c.b16 %v601, %v599
    %v644 = vpack.c.b16 %v602, %v600
    %v645 = vpack.c.b16 %v605, %v603
    %v646 = vpack.c.b16 %v606, %v604
    %v647 = vpack.c.b16 %v609, %v607
    %v648 = vpack.c.b16 %v610, %v608
    %v649 = vpack.c.b16 %v613, %v611
    %v650 = vpack.c.b16 %v614, %v612
    %vm687 = vcmask 261120
    %v689 = vsel %vm687, %v459, 0
    %691 = vmatprep.subr.bf16.mxu0 %v616
    %692 = vmatpush1.bf16.msra.mxu0 %v615
    %693 = vmatprep.subr.bf16.mxu0 %v618
    %694 = vmatpush1.bf16.msra.mxu0 %v617
    %695 = vmatprep.subr.bf16.mxu0 %v620
    %696 = vmatpush1.bf16.msra.mxu0 %v619
    %697 = vmatprep.subr.bf16.mxu0 %v622
    %698 = vmatpush1.bf16.msra.mxu0 %v621
    %699 = vmatprep.subr.bf16.mxu0 %v624
    %700 = vmatpush1.bf16.msra.mxu0 %v623
    %701 = vmatprep.subr.bf16.mxu0 %v626
    %702 = vmatpush1.bf16.msra.mxu0 %v625
    %703 = vmatprep.subr.bf16.mxu0 %v628
    %704 = vmatpush1.bf16.msra.mxu0 %v627
    %705 = vmatprep.subr.bf16.mxu0 %v630
    %706 = vmatpush1.bf16.msra.mxu0 %v629
    %707 = vmatprep.subr.bf16.mxu0 %v632
    %708 = vmatpush1.bf16.msra.mxu0 %v631
    %709 = vmatprep.subr.bf16.mxu0 %v634
    %710 = vmatpush1.bf16.msra.mxu0 %v633
    %711 = vmatprep.subr.bf16.mxu0 %v636
    %712 = vmatpush1.bf16.msra.mxu0 %v635
    %713 = vmatprep.subr.bf16.mxu0 %v638
    %714 = vmatpush1.bf16.msra.mxu0 %v637
    %715 = vmatprep.subr.bf16.mxu0 %v640
    %716 = vmatpush1.bf16.msra.mxu0 %v639
    %717 = vmatprep.subr.bf16.mxu0 %v642
    %718 = vmatpush1.bf16.msra.mxu0 %v641
    %719 = vmatprep.subr.bf16.mxu0 %v644
    %720 = vmatpush1.bf16.msra.mxu0 %v643
    %721 = vmatprep.subr.bf16.mxu0 %v646
    %722 = vmatpush1.bf16.msra.mxu0 %v645
    %723 = vmatprep.mubr.bf16.mxu0 %v458
    %724 = vmatmul.mubr.bf16.gmra.mrb[0].mxu0 %v457
    %v725 = vpop.f32.mrb[0].mxu0
    %v726 = vadd.f32 %v502, %v725
    %v727 = vpop.f32.mrb[0].mxu0
    %v728 = vadd.f32 %v506, %v727
    %v729 = vpop.f32.mrb[0].mxu0
    %v730 = vpop.f32.mrb[0].mxu0
    %731 = vdwg.mxu0
    %732 = vmatprep.subr.bf16.mxu0 %v648
    %733 = vmatpush1.bf16.msra.mxu0 %v647
    %734 = vmatprep.subr.bf16.mxu0 %v650
    %735 = vmatpush1.bf16.msra.mxu0 %v649
    %736 = vmatprep.subr.bf16.mxu0 0
    %737 = vmatpush1.bf16.msra.mxu0 0
    %738 = vmatprep.subr.bf16.mxu0 0
    %739 = vmatpush1.bf16.msra.mxu0 0
    %740 = vmatprep.subr.bf16.mxu0 0
    %741 = vmatpush1.bf16.msra.mxu0 0
    %742 = vmatprep.subr.bf16.mxu0 0
    %743 = vmatpush1.bf16.msra.mxu0 0
    %744 = vmatprep.subr.bf16.mxu0 0
    %745 = vmatpush1.bf16.msra.mxu0 0
    %746 = vmatprep.subr.bf16.mxu0 0
    %747 = vmatpush1.bf16.msra.mxu0 0
    %748 = vmatprep.subr.bf16.mxu0 0
    %749 = vmatpush1.bf16.msra.mxu0 0
    %750 = vmatprep.subr.bf16.mxu0 0
    %751 = vmatpush1.bf16.msra.mxu0 0
    %752 = vmatprep.subr.bf16.mxu0 0
    %753 = vmatpush1.bf16.msra.mxu0 0
    %754 = vmatprep.subr.bf16.mxu0 0
    %755 = vmatpush1.bf16.msra.mxu0 0
    %756 = vmatprep.subr.bf16.mxu0 0
    %757 = vmatpush1.bf16.msra.mxu0 0
    %758 = vmatprep.subr.bf16.mxu0 0
    %759 = vmatpush1.bf16.msra.mxu0 0
    %760 = vmatprep.subr.bf16.mxu0 0
    %761 = vmatpush1.bf16.msra.mxu0 0
    %762 = vmatprep.subr.bf16.mxu0 0
    %763 = vmatpush1.bf16.msra.mxu0 0
    %764 = vmatprep.mubr.bf16.mxu0 0
    %765 = vmatmul.mubr.bf16.gmra.mrb[0].mxu0 %v689
    %v766 = vpop.f32.mrb[0].mxu0
    %v767 = vadd.f32 %v726, %v766
    %v768 = vpop.f32.mrb[0].mxu0
    %v769 = vadd.f32 %v728, %v768
    %v770 = vpop.f32.mrb[0].mxu0
    %v771 = vpop.f32.mrb[0].mxu0
    %772 = vdwg.mxu0
    %v773 = vmax.f32 %v767, 0.0
    %v774 = vmax.f32 %v769, 0.0
    %v775 = vpack.c.bf16 %v773, %v773
    %v776 = vpack.c.bf16 %v774, %v774
    %v777 = vld [vmem:[%s5] sm:$0xf]
    %v778 = vld [vmem:[%s5 + $0x4] sm:$0xf]
    %v779 = vld [vmem:[%s5 + $0x8] sm:$0xf]
    %v780 = vld [vmem:[%s5 + $0xc] sm:$0xf]
    %v781 = vld [vmem:[%s5 + $0x10] sm:$0xf]
    %v782 = vld [vmem:[%s5 + $0x14] sm:$0xf]
    %v783 = vld [vmem:[%s5 + $0x18] sm:$0xf]
    %v784 = vld [vmem:[%s5 + $0x1c] sm:$0xf]
    %v785 = vld [vmem:[%s5 + $0x20] sm:$0xf]
    %v786 = vld [vmem:[%s5 + $0x24] sm:$0xf]
    %v787 = vld [vmem:[%s5 + $0x28] sm:$0xf]
    %v788 = vld [vmem:[%s5 + $0x2c] sm:$0xf]
    %v789 = vld [vmem:[%s5 + $0x30] sm:$0xf]
    %v790 = vld [vmem:[%s5 + $0x34] sm:$0xf]
    %v791 = vld [vmem:[%s5 + $0x38] sm:$0xf]
    %v792 = vld [vmem:[%s5 + $0x3c] sm:$0xf]
    %v793 = vld [vmem:[%s5 + $0x40] sm:$0xf]
    %v794 = vld [vmem:[%s5 + $0x44] sm:$0xf]
    %v795 = vld [vmem:[%s5 + $0x48] sm:$0xf]
    %v796 = vld [vmem:[%s5 + $0x4c] sm:$0xf]
    %v797 = vld [vmem:[%s5 + $0x50] sm:$0xf]
    %v798 = vld [vmem:[%s5 + $0x54] sm:$0xf]
    %v799 = vld [vmem:[%s5 + $0x58] sm:$0xf]
    %v800 = vld [vmem:[%s5 + $0x5c] sm:$0xf]
    %v801 = vld [vmem:[%s5 + $0x60] sm:$0x1]
    %v802 = vunpack.c.l.bf16 %v801
    %v803 = vlaneseq
    %v804 = vshrl.u32 %v803, 7
    %v805 = vsub.s32 0, %v804
    %v806 = vrot.slane %v802, %v805
    %v831 = vunpack.c.l.b16 %v777
    %v832 = vunpack.c.l.b16 %v778
    %v833 = vunpack.c.l.b16 %v779
    %v834 = vunpack.c.l.b16 %v780
    %v835 = vunpack.c.l.b16 %v781
    %v836 = vunpack.c.l.b16 %v782
    %v837 = vunpack.c.l.b16 %v783
    %v838 = vunpack.c.l.b16 %v784
    %v839 = vunpack.c.l.b16 %v785
    %v840 = vunpack.c.l.b16 %v786
    %v841 = vunpack.c.l.b16 %v787
    %v842 = vunpack.c.l.b16 %v788
    %v843 = vunpack.c.l.b16 %v789
    %v844 = vunpack.c.l.b16 %v790
    %v845 = vunpack.c.l.b16 %v791
    %v846 = vunpack.c.l.b16 %v792
    %v847 = vunpack.c.l.b16 %v793
    %v848 = vunpack.c.l.b16 %v794
    %v849 = vunpack.c.l.b16 %v795
    %v850 = vunpack.c.l.b16 %v796
    %v851 = vunpack.c.l.b16 %v797
    %v852 = vunpack.c.l.b16 %v798
    %v853 = vunpack.c.l.b16 %v799
    %v854 = vunpack.c.l.b16 %v800
    %v855 = vpack.c.b16 %v832, %v831
    %v856 = vpack.c.b16 %v834, %v833
    %v857 = vpack.c.b16 %v836, %v835
    %v858 = vpack.c.b16 %v838, %v837
    %v859 = vpack.c.b16 %v840, %v839
    %v860 = vpack.c.b16 %v842, %v841
    %v861 = vpack.c.b16 %v844, %v843
    %v862 = vpack.c.b16 %v846, %v845
    %v863 = vpack.c.b16 %v848, %v847
    %v864 = vpack.c.b16 %v850, %v849
    %v865 = vpack.c.b16 %v852, %v851
    %v866 = vpack.c.b16 %v854, %v853
    %vm879 = vcmask 523264
    %v881 = vsel %vm879, %v776, 0
    %883 = vmatprep.subr.bf16.mxu0 0
    %884 = vmatpush1.bf16.msra.mxu0 %v855
    %885 = vmatprep.subr.bf16.mxu0 0
    %886 = vmatpush1.bf16.msra.mxu0 %v856
    %887 = vmatprep.subr.bf16.mxu0 0
    %888 = vmatpush1.bf16.msra.mxu0 %v857
    %889 = vmatprep.subr.bf16.mxu0 0
    %890 = vmatpush1.bf16.msra.mxu0 %v858
    %891 = vmatprep.subr.bf16.mxu0 0
    %892 = vmatpush1.bf16.msra.mxu0 %v859
    %893 = vmatprep.subr.bf16.mxu0 0
    %894 = vmatpush1.bf16.msra.mxu0 %v860
    %895 = vmatprep.subr.bf16.mxu0 0
    %896 = vmatpush1.bf16.msra.mxu0 %v861
    %897 = vmatprep.subr.bf16.mxu0 0
    %898 = vmatpush1.bf16.msra.mxu0 %v862
    %899 = vmatprep.subr.bf16.mxu0 0
    %900 = vmatpush1.bf16.msra.mxu0 %v863
    %901 = vmatprep.subr.bf16.mxu0 0
    %902 = vmatpush1.bf16.msra.mxu0 %v864
    %903 = vmatprep.subr.bf16.mxu0 0
    %904 = vmatpush1.bf16.msra.mxu0 %v865
    %905 = vmatprep.subr.bf16.mxu0 0
    %906 = vmatpush1.bf16.msra.mxu0 %v866
    %907 = vmatprep.subr.bf16.mxu0 0
    %908 = vmatpush1.bf16.msra.mxu0 0
    %909 = vmatprep.subr.bf16.mxu0 0
    %910 = vmatpush1.bf16.msra.mxu0 0
    %911 = vmatprep.subr.bf16.mxu0 0
    %912 = vmatpush1.bf16.msra.mxu0 0
    %913 = vmatprep.subr.bf16.mxu0 0
    %914 = vmatpush1.bf16.msra.mxu0 0
    %915 = vmatprep.mubr.bf16.mxu0 %v881
    %916 = vmatmul.mubr.bf16.gmra.mrb[0].mxu0 %v775
    %v917 = vpop.f32.mrb[0].mxu0
    %v918 = vadd.f32 %v806, %v917
    %v919 = vpop.f32.mrb[0].mxu0
    %v920 = vpop.f32.mrb[0].mxu0
    %v921 = vpop.f32.mrb[0].mxu0
    %922 = vdwg.mxu0
    %923 = vst [vmem:[#allocation2] sm:$0x3] %v918
    // Predicated region
    $region26: #{tpu_custom_call.1} parent=1 // pred_check
      _
    $region27: #{tpu_custom_call.1} parent=1 // pred_check_branch
      %925 = sbr.rel (0) target = $region29
    $region28: #{tpu_custom_call.1} parent=1 // pred_region
      %s927 = ssub.s32 32, 32
      %928 = vsyncadd [#allocation3], %s927
      %s930 = sshll.u32 [#allocation2], 4
      %s931 = int_to_ptr.vmem [resolvable:$true] %s930
      %933 = dma.vmem_to_hbm [thread:$0]  %s931, 32, %s6, [#allocation3]
    $region29: #{tpu_custom_call.1} parent=1 // pred_fallthru
      _
    // Predicated region
    $region30: #{tpu_custom_call.1} parent=1 // pred_check
      _
    $region31: #{tpu_custom_call.1} parent=1 // pred_check_branch
      %935 = sbr.rel (0) target = $region33
    $region32: #{tpu_custom_call.1} parent=1 // pred_region
      %936 = dma.done [#allocation3], 32
    $region33: #{tpu_custom_call.1} parent=1 // pred_fallthru
      _
    %937 = vsyncpa [#allocation3], 1

</llo_original>
